<compile_context>
chip_gen: v6e
topology: v6e:2x2x1
jax: 0.10.0
libtpu: 0.0.40
codegen_flags: <defaults>
</compile_context>

<pallas_src>
import functools

import jax
import jax.numpy as jnp
from jax.experimental import pallas as pl
from jax.experimental.pallas import tpu as pltpu

LANE = 128      # lane width (last dim)
SUBLANE = 16    # bf16 sublane packing (second-to-last dim)


def _round_up(x, m):
    return (x + m - 1) // m * m


# ----------------------------- Pallas kernel ------------------------------ #
def _sages_fused_kernel(acts, a_ref, x_ref, w_ref, b_ref, o_ref):
    """Fused SAGEs forward: every SAGEConv layer of every block in one kernel.

    a_ref : (Np, Np)         bf16 row-mean-normalized adjacency (zero padded)
    x_ref : (Np, Dp)         bf16 node features (features zero-padded to Dp)
    w_ref : (L, 2*Dp, Dp)    bf16 per-layer stacked [Wl; Wr] (zero padded)
    b_ref : (L, 1, Dp)       f32  per-layer lin_l bias (zero padded)
    o_ref : (Np, Dp)         f32  output of the last layer (post-ELU)
    acts  : static tuple of per-layer activations ("relu" / "elu")
    """
    a = a_ref[...]                       # bf16, stays resident for all layers
    h = x_ref[...]                       # bf16 running activation
    out_f32 = None
    for l, act in enumerate(acts):       # static unrolled loop (L is small)
        # mean aggregation on the MXU: (Np, Np) @ (Np, Dp)
        agg = jnp.dot(a, h, preferred_element_type=jnp.float32)
        # single merged feature matmul: [agg, h] @ [Wl; Wr]
        cat = jnp.concatenate([agg.astype(jnp.bfloat16), h], axis=-1)
        out = jnp.dot(cat, w_ref[l], preferred_element_type=jnp.float32)
        out = out + b_ref[l]
        if act == "relu":
            out = jnp.maximum(out, 0.0)
        else:  # "elu"
            # exp(min(x,0)) - 1 ~= expm1(x) on the negative branch; the clamp
            # avoids overflow in the unselected branch. (expm1 kept out of the
            # kernel to guarantee Mosaic lowering.)
            out = jnp.where(out > 0.0, out, jnp.exp(jnp.minimum(out, 0.0)) - 1.0)
        out_f32 = out
        h = out.astype(jnp.bfloat16)     # next layer's bf16 operand
    o_ref[...] = out_f32.astype(o_ref.dtype)


# ------------------------------- glue (JAX) -------------------------------- #
def build_mean_adj(edge_index, num_nodes, num_padded):
    """Dense mean-aggregation matrix A[i, j] = (#edges j->i) / deg_in(i), padded."""
    src, dst = edge_index[0], edge_index[1]
    a = jnp.zeros((num_padded, num_padded), jnp.float32).at[dst, src].add(1.0)
    deg = a.sum(axis=1, keepdims=True)
    a = a / jnp.maximum(deg, 1.0)
    return a.astype(jnp.bfloat16)


def init_sage_conv_params(key, din, dout):
    k1, k2, k3 = jax.random.split(key, 3)
    s = 1.0 / jnp.sqrt(jnp.float32(din))
    return {
        "wl": jax.random.uniform(k1, (din, dout), jnp.float32, -s, s),
        "wr": jax.random.uniform(k2, (din, dout), jnp.float32, -s, s),
        "b": jax.random.uniform(k3, (1, dout), jnp.float32, -s, s),
    }


def graphsage_block_dims(din, hidden, depth, dout):
    """Layer (in, out) dims of a PyG GraphSAGE(in, hidden, depth, out)."""
    if depth == 1:
        return [(din, dout)]
    dims = [(din, hidden)]
    dims += [(hidden, hidden)] * (depth - 2)
    dims += [(hidden, dout)]
    return dims


def init_sages_params(key, input_dim, embedding_dim, output_dim, search_depth, n_layers):
    params = []
    for layer in range(n_layers):
        din = input_dim if layer == 0 else output_dim
        dims = graphsage_block_dims(din, embedding_dim, search_depth, output_dim)
        block = []
        for (i, o) in dims:
            key, sub = jax.random.split(key)
            block.append(init_sage_conv_params(sub, i, o))
        params.append(block)
    return params


def sages_forward(x, edge_index, edge_feats, params, dropout_rate=0.0):
    del edge_feats    # unused by the reference forward
    del dropout_rate  # dropout treated as identity (see TODO above)

    n, din = x.shape

    # flatten layers + the static activation schedule
    layers = [p for block in params for p in block]
    acts = []
    for block in params:
        depth = len(block)
        for d in range(depth):
            # ReLU between internal SAGEConv layers; the outer F.elu applied
            # to the block output is fused into the last conv of the block.
            acts.append("relu" if d < depth - 1 else "elu")

    dout_final = layers[-1]["wl"].shape[1]
    max_feat = max([din] + [p["wl"].shape[0] for p in layers]
                   + [p["wl"].shape[1] for p in layers])
    dp = _round_up(max_feat, LANE)             # lane-dense feature width
    np_ = _round_up(max(n, SUBLANE), SUBLANE)  # bf16 sublane-aligned node count

    # padded bf16 operands
    a = build_mean_adj(edge_index, n, np_)                                 # (Np, Np)
    x_pad = (jnp.zeros((np_, dp), jnp.float32)
             .at[:n, :din].set(x.astype(jnp.float32))
             .astype(jnp.bfloat16))                                        # (Np, Dp)

    # stack [Wl; Wr] per layer into one (2*Dp, Dp) bf16 weight, biases in f32
    w_list, b_list = [], []
    for p in layers:
        di, do = p["wl"].shape
        w = jnp.zeros((2 * dp, dp), jnp.float32)
        w = w.at[:di, :do].set(p["wl"])
        w = w.at[dp:dp + di, :do].set(p["wr"])
        w_list.append(w.astype(jnp.bfloat16))
        b_list.append(jnp.zeros((1, dp), jnp.float32).at[:, :do].set(p["b"]))
    w_all = jnp.stack(w_list)   # (L, 2*Dp, Dp) bf16
    b_all = jnp.stack(b_list)   # (L, 1, Dp)    f32

    num_layers = len(layers)
    flops = num_layers * (2 * np_ * np_ * dp + 2 * np_ * (2 * dp) * dp)
    bytes_accessed = (a.size * 2 + x_pad.size * 2 + w_all.size * 2
                      + b_all.size * 4 + np_ * dp * 4)
    vmem_limit = max(4 * int(bytes_accessed), 16 * 1024 * 1024)

    vmem = pl.BlockSpec(memory_space=pltpu.MemorySpace.VMEM)
    out = pl.pallas_call(
        functools.partial(_sages_fused_kernel, tuple(acts)),
        out_shape=jax.ShapeDtypeStruct((np_, dp), jnp.float32),
        in_specs=[vmem, vmem, vmem, vmem],
        out_specs=vmem,
        compiler_params=pltpu.CompilerParams(vmem_limit_bytes=vmem_limit),
        cost_estimate=pl.CostEstimate(
            flops=int(flops),
            transcendentals=int(len(params) * np_ * dp),
            bytes_accessed=int(bytes_accessed),
        ),
    )(a, x_pad, w_all, b_all)

    return out[:n, :dout_final]


# --------------------------------- main ------------------------------------ #
if __name__ == "__main__":
    input_dim = 16
    embedding_dim = 32
    output_dim = 32
    search_depth = 2
    n_layers = 2
    dropout_rate = 0.0

    num_nodes = 16
    num_edges = 48
    edge_dim = 4

    key = jax.random.PRNGKey(0)
    kx, ke, kf, kp = jax.random.split(key, 4)

    x = jax.random.normal(kx, (num_nodes, input_dim), jnp.float32)
    edge_index = jax.random.randint(ke, (2, num_edges), 0, num_nodes, jnp.int32)
    edge_feats = jax.random.normal(kf, (num_edges, edge_dim), jnp.float32)  # unused

    params = init_sages_params(
        kp, input_dim, embedding_dim, output_dim, search_depth, n_layers
    )

    out = sages_forward(x, edge_index, edge_feats, params, dropout_rate)
    out = jax.block_until_ready(out)
    assert out.shape == (num_nodes, output_dim)
    assert jnp.all(jnp.isfinite(out))
    print("KERNEL_OK")
</pallas_src>

<mosaic_0001>
module attributes {stable_mosaic.version = 11 : i64} {
  func.func @_sages_fused_kernel(%arg0: memref<16x16xbf16, #tpu.memory_space<vmem>>, %arg1: memref<16x128xbf16, #tpu.memory_space<vmem>>, %arg2: memref<4x256x128xbf16, #tpu.memory_space<vmem>>, %arg3: memref<4x1x128xf32, #tpu.memory_space<vmem>>, %arg4: memref<16x128xf32, #tpu.memory_space<vmem>>) attributes {dimension_semantics = [], scalar_prefetch = 0 : i64, scratch_operands = 0 : i64, tpu.core_type = #tpu.core_type<tc>} {
    %c0 = arith.constant 0 : index
    %c0_0 = arith.constant 0 : index
    %0 = vector.load %arg0[%c0, %c0_0] : memref<16x16xbf16, #tpu.memory_space<vmem>>, vector<16x16xbf16>
    %c0_1 = arith.constant 0 : index
    %c0_2 = arith.constant 0 : index
    %1 = vector.load %arg1[%c0_1, %c0_2] : memref<16x128xbf16, #tpu.memory_space<vmem>>, vector<16x128xbf16>
    %cst = arith.constant dense<0.000000e+00> : vector<16x128xf32>
    %2 = tpu.matmul %0, %1, %cst {dimension_numbers = #tpu.dot_dimension_numbers<[1], [0], [0], [1], [0, 0, 1, 1], [], []>} : vector<16x16xbf16>, vector<16x128xbf16>, vector<16x128xf32> -> vector<16x128xf32>
    %3 = arith.truncf %2 : vector<16x128xf32> to vector<16x128xbf16>
    %4 = tpu.concatenate %3, %1 in 1 : vector<16x128xbf16>, vector<16x128xbf16> -> vector<16x256xbf16>
    %c0_3 = arith.constant 0 : index
    %c0_4 = arith.constant 0 : index
    %c0_5 = arith.constant 0 : index
    %5 = vector.load %arg2[%c0_3, %c0_4, %c0_5] : memref<4x256x128xbf16, #tpu.memory_space<vmem>>, vector<1x256x128xbf16>
    %6 = vector.shape_cast %5 : vector<1x256x128xbf16> to vector<256x128xbf16>
    %cst_6 = arith.constant dense<0.000000e+00> : vector<16x128xf32>
    %7 = tpu.matmul %4, %6, %cst_6 {dimension_numbers = #tpu.dot_dimension_numbers<[1], [0], [0], [1], [0, 0, 1, 1], [], []>} : vector<16x256xbf16>, vector<256x128xbf16>, vector<16x128xf32> -> vector<16x128xf32>
    %c0_7 = arith.constant 0 : index
    %c0_8 = arith.constant 0 : index
    %c0_9 = arith.constant 0 : index
    %8 = vector.load %arg3[%c0_7, %c0_8, %c0_9] : memref<4x1x128xf32, #tpu.memory_space<vmem>>, vector<1x1x128xf32>
    %9 = vector.shape_cast %8 : vector<1x1x128xf32> to vector<1x128xf32>
    %10 = vector.broadcast %9 : vector<1x128xf32> to vector<16x128xf32>
    %11 = arith.addf %7, %10 : vector<16x128xf32>
    %cst_10 = arith.constant 0.000000e+00 : f32
    %12 = vector.broadcast %cst_10 : f32 to vector<16x128xf32>
    %13 = arith.maximumf %11, %12 : vector<16x128xf32>
    %14 = arith.truncf %13 : vector<16x128xf32> to vector<16x128xbf16>
    %cst_11 = arith.constant dense<0.000000e+00> : vector<16x128xf32>
    %15 = tpu.matmul %0, %14, %cst_11 {dimension_numbers = #tpu.dot_dimension_numbers<[1], [0], [0], [1], [0, 0, 1, 1], [], []>} : vector<16x16xbf16>, vector<16x128xbf16>, vector<16x128xf32> -> vector<16x128xf32>
    %16 = arith.truncf %15 : vector<16x128xf32> to vector<16x128xbf16>
    %17 = tpu.concatenate %16, %14 in 1 : vector<16x128xbf16>, vector<16x128xbf16> -> vector<16x256xbf16>
    %c1 = arith.constant 1 : index
    %c0_12 = arith.constant 0 : index
    %c0_13 = arith.constant 0 : index
    %18 = vector.load %arg2[%c1, %c0_12, %c0_13] : memref<4x256x128xbf16, #tpu.memory_space<vmem>>, vector<1x256x128xbf16>
    %19 = vector.shape_cast %18 : vector<1x256x128xbf16> to vector<256x128xbf16>
    %cst_14 = arith.constant dense<0.000000e+00> : vector<16x128xf32>
    %20 = tpu.matmul %17, %19, %cst_14 {dimension_numbers = #tpu.dot_dimension_numbers<[1], [0], [0], [1], [0, 0, 1, 1], [], []>} : vector<16x256xbf16>, vector<256x128xbf16>, vector<16x128xf32> -> vector<16x128xf32>
    %c1_15 = arith.constant 1 : index
    %c0_16 = arith.constant 0 : index
    %c0_17 = arith.constant 0 : index
    %21 = vector.load %arg3[%c1_15, %c0_16, %c0_17] : memref<4x1x128xf32, #tpu.memory_space<vmem>>, vector<1x1x128xf32>
    %22 = vector.shape_cast %21 : vector<1x1x128xf32> to vector<1x128xf32>
    %23 = vector.broadcast %22 : vector<1x128xf32> to vector<16x128xf32>
    %24 = arith.addf %20, %23 : vector<16x128xf32>
    %cst_18 = arith.constant 0.000000e+00 : f32
    %25 = vector.broadcast %cst_18 : f32 to vector<16x128xf32>
    %26 = arith.cmpf ogt, %24, %25 : vector<16x128xf32>
    %cst_19 = arith.constant 0.000000e+00 : f32
    %27 = vector.broadcast %cst_19 : f32 to vector<16x128xf32>
    %28 = arith.minimumf %24, %27 : vector<16x128xf32>
    %29 = math.exp %28 : vector<16x128xf32>
    %cst_20 = arith.constant 1.000000e+00 : f32
    %30 = vector.broadcast %cst_20 : f32 to vector<16x128xf32>
    %31 = arith.subf %29, %30 : vector<16x128xf32>
    %32 = arith.select %26, %24, %31 : vector<16x128xi1>, vector<16x128xf32>
    %33 = arith.truncf %32 : vector<16x128xf32> to vector<16x128xbf16>
    %cst_21 = arith.constant dense<0.000000e+00> : vector<16x128xf32>
    %34 = tpu.matmul %0, %33, %cst_21 {dimension_numbers = #tpu.dot_dimension_numbers<[1], [0], [0], [1], [0, 0, 1, 1], [], []>} : vector<16x16xbf16>, vector<16x128xbf16>, vector<16x128xf32> -> vector<16x128xf32>
    %35 = arith.truncf %34 : vector<16x128xf32> to vector<16x128xbf16>
    %36 = tpu.concatenate %35, %33 in 1 : vector<16x128xbf16>, vector<16x128xbf16> -> vector<16x256xbf16>
    %c2 = arith.constant 2 : index
    %c0_22 = arith.constant 0 : index
    %c0_23 = arith.constant 0 : index
    %37 = vector.load %arg2[%c2, %c0_22, %c0_23] : memref<4x256x128xbf16, #tpu.memory_space<vmem>>, vector<1x256x128xbf16>
    %38 = vector.shape_cast %37 : vector<1x256x128xbf16> to vector<256x128xbf16>
    %cst_24 = arith.constant dense<0.000000e+00> : vector<16x128xf32>
    %39 = tpu.matmul %36, %38, %cst_24 {dimension_numbers = #tpu.dot_dimension_numbers<[1], [0], [0], [1], [0, 0, 1, 1], [], []>} : vector<16x256xbf16>, vector<256x128xbf16>, vector<16x128xf32> -> vector<16x128xf32>
    %c2_25 = arith.constant 2 : index
    %c0_26 = arith.constant 0 : index
    %c0_27 = arith.constant 0 : index
    %40 = vector.load %arg3[%c2_25, %c0_26, %c0_27] : memref<4x1x128xf32, #tpu.memory_space<vmem>>, vector<1x1x128xf32>
    %41 = vector.shape_cast %40 : vector<1x1x128xf32> to vector<1x128xf32>
    %42 = vector.broadcast %41 : vector<1x128xf32> to vector<16x128xf32>
    %43 = arith.addf %39, %42 : vector<16x128xf32>
    %cst_28 = arith.constant 0.000000e+00 : f32
    %44 = vector.broadcast %cst_28 : f32 to vector<16x128xf32>
    %45 = arith.maximumf %43, %44 : vector<16x128xf32>
    %46 = arith.truncf %45 : vector<16x128xf32> to vector<16x128xbf16>
    %cst_29 = arith.constant dense<0.000000e+00> : vector<16x128xf32>
    %47 = tpu.matmul %0, %46, %cst_29 {dimension_numbers = #tpu.dot_dimension_numbers<[1], [0], [0], [1], [0, 0, 1, 1], [], []>} : vector<16x16xbf16>, vector<16x128xbf16>, vector<16x128xf32> -> vector<16x128xf32>
    %48 = arith.truncf %47 : vector<16x128xf32> to vector<16x128xbf16>
    %49 = tpu.concatenate %48, %46 in 1 : vector<16x128xbf16>, vector<16x128xbf16> -> vector<16x256xbf16>
    %c3 = arith.constant 3 : index
    %c0_30 = arith.constant 0 : index
    %c0_31 = arith.constant 0 : index
    %50 = vector.load %arg2[%c3, %c0_30, %c0_31] : memref<4x256x128xbf16, #tpu.memory_space<vmem>>, vector<1x256x128xbf16>
    %51 = vector.shape_cast %50 : vector<1x256x128xbf16> to vector<256x128xbf16>
    %cst_32 = arith.constant dense<0.000000e+00> : vector<16x128xf32>
    %52 = tpu.matmul %49, %51, %cst_32 {dimension_numbers = #tpu.dot_dimension_numbers<[1], [0], [0], [1], [0, 0, 1, 1], [], []>} : vector<16x256xbf16>, vector<256x128xbf16>, vector<16x128xf32> -> vector<16x128xf32>
    %c3_33 = arith.constant 3 : index
    %c0_34 = arith.constant 0 : index
    %c0_35 = arith.constant 0 : index
    %53 = vector.load %arg3[%c3_33, %c0_34, %c0_35] : memref<4x1x128xf32, #tpu.memory_space<vmem>>, vector<1x1x128xf32>
    %54 = vector.shape_cast %53 : vector<1x1x128xf32> to vector<1x128xf32>
    %55 = vector.broadcast %54 : vector<1x128xf32> to vector<16x128xf32>
    %56 = arith.addf %52, %55 : vector<16x128xf32>
    %cst_36 = arith.constant 0.000000e+00 : f32
    %57 = vector.broadcast %cst_36 : f32 to vector<16x128xf32>
    %58 = arith.cmpf ogt, %56, %57 : vector<16x128xf32>
    %cst_37 = arith.constant 0.000000e+00 : f32
    %59 = vector.broadcast %cst_37 : f32 to vector<16x128xf32>
    %60 = arith.minimumf %56, %59 : vector<16x128xf32>
    %61 = math.exp %60 : vector<16x128xf32>
    %cst_38 = arith.constant 1.000000e+00 : f32
    %62 = vector.broadcast %cst_38 : f32 to vector<16x128xf32>
    %63 = arith.subf %61, %62 : vector<16x128xf32>
    %64 = arith.select %58, %56, %63 : vector<16x128xi1>, vector<16x128xf32>
    %c0_39 = arith.constant 0 : index
    %c0_40 = arith.constant 0 : index
    %65 = vector.load %arg4[%c0_39, %c0_40] : memref<16x128xf32, #tpu.memory_space<vmem>>, vector<16x128xf32>
    tpu.vector_store %arg4[%c0_39, %c0_40], %64 {strides = array<i32>} : memref<16x128xf32, #tpu.memory_space<vmem>>, vector<16x128xf32>,
    return
  }
}

</mosaic_0001>

<llo_original>
// kernel: tpu_custom_call.1
$region0: #{tpu_custom_call.1}
  #allocation0 [shape = 'u32[]', space=smem, size = 0x4, offset = 0x4, fixed_abs, tag = 'smem constant byte address 0x4 - core index']
  #allocation1 [shape = 'u32[144,128]{1,0:T(1,128)}', space=vmem, size = 0x12000, scoped, tag = 'internal scratch']
  %s0 = inlined_call_operand.hbm [shape: bf16[16,16], index: 0, kind: input, shape index: {}]
  %s1 = inlined_call_operand.hbm [shape: bf16[16,128], index: 1, kind: input, shape index: {}]
  %s2 = inlined_call_operand.hbm [shape: bf16[4,256,128], index: 2, kind: input, shape index: {}]
  %s3 = inlined_call_operand.vmem [shape: f32[4,1,128], index: 3, kind: input, shape index: {}]
  %s4 = inlined_call_operand.hbm [shape: f32[16,128], index: 4, kind: output, shape index: {}]
  %s5 = sld [smem:[#allocation0]]
  $region38: #{tpu_custom_call.1} parent=0
    _
  %s7 = ssub.s32 1, %s5
  %s8 = scalar_select 0, %s7, %s5
  $region1: #{tpu_custom_call.1} parent=0
    #allocation2 [shape = 'u8[4096]{0}', space=vmem, size = 0x1000, scoped, tag = 'input window, operand 0, single buffered']
    #allocation3 [shape = 's32[1]{0}', space=sflag, size = 0x4, scoped, tag = 'scoped memory for tpu_custom_call.1']
    #allocation4 [shape = 's32[1]{0}', space=sflag, size = 0x4, scoped, tag = 'scoped memory for tpu_custom_call.1']
    #allocation5 [shape = 'u8[4096]{0}', space=vmem, size = 0x1000, scoped, tag = 'input window, operand 1, single buffered']
    #allocation6 [shape = 's32[1]{0}', space=sflag, size = 0x4, scoped, tag = 'scoped memory for tpu_custom_call.1']
    #allocation7 [shape = 'u8[262144]{0}', space=vmem, size = 0x40000, scoped, tag = 'input window, operand 2, single buffered']
    #allocation8 [shape = 'u8[8192]{0}', space=vmem, size = 0x2000, scoped, tag = 'output window, operand 0, single buffered']
    %9 = vsyncpa [#allocation3], 0
    %10 = vsyncpa [#allocation6], 0
    %11 = vsyncpa [#allocation4], 0
    // Predicated region
    $region2: #{tpu_custom_call.1} parent=1 // pred_check
      _
    $region3: #{tpu_custom_call.1} parent=1 // pred_check_branch
      %13 = sbr.rel (0) target = $region5
    $region4: #{tpu_custom_call.1} parent=1 // pred_region
      %s15 = ssub.s32 128, 128
      %16 = vsyncadd [#allocation3], %s15
      %s17 = sshll.u32 [#allocation2], 4
      %s18 = int_to_ptr.vmem [resolvable:$true] %s17
      %23 = dma.hbm_to_vmem [thread:$0]  %s0, 128, %s18, [#allocation3], 64, 64, 4
    $region5: #{tpu_custom_call.1} parent=1 // pred_fallthru
      _
    // Predicated region
    $region6: #{tpu_custom_call.1} parent=1 // pred_check
      _
    $region7: #{tpu_custom_call.1} parent=1 // pred_check_branch
      %25 = sbr.rel (0) target = $region9
    $region8: #{tpu_custom_call.1} parent=1 // pred_region
      %s27 = ssub.s32 128, 128
      %28 = vsyncadd [#allocation6], %s27
      %s29 = sshll.u32 [#allocation5], 4
      %s30 = int_to_ptr.vmem [resolvable:$true] %s29
      %35 = dma.hbm_to_vmem [thread:$0]  %s1, 128, %s30, [#allocation6], 64, 64, 4
    $region9: #{tpu_custom_call.1} parent=1 // pred_fallthru
      _
    // Predicated region
    $region10: #{tpu_custom_call.1} parent=1 // pred_check
      _
    $region11: #{tpu_custom_call.1} parent=1 // pred_check_branch
      %37 = sbr.rel (0) target = $region13
    $region12: #{tpu_custom_call.1} parent=1 // pred_region
      %s39 = ssub.s32 8192, 8192
      %40 = vsyncadd [#allocation6], %s39
      %s41 = sshll.u32 [#allocation7], 4
      %s42 = int_to_ptr.vmem [resolvable:$true] %s41
      %47 = dma.hbm_to_vmem [thread:$0]  %s2, 8192, %s42, [#allocation6], 64, 64, 4
    $region13: #{tpu_custom_call.1} parent=1 // pred_fallthru
      _
    // Predicated region
    $region14: #{tpu_custom_call.1} parent=1 // pred_check
      _
    $region15: #{tpu_custom_call.1} parent=1 // pred_check_branch
      %49 = sbr.rel (0) target = $region17
    $region16: #{tpu_custom_call.1} parent=1 // pred_region
      _
    $region17: #{tpu_custom_call.1} parent=1 // pred_fallthru
      _
    // Predicated region
    $region18: #{tpu_custom_call.1} parent=1 // pred_check
      _
    $region19: #{tpu_custom_call.1} parent=1 // pred_check_branch
      %51 = sbr.rel (0) target = $region21
    $region20: #{tpu_custom_call.1} parent=1 // pred_region
      %52 = dma.done [#allocation3], 128
    $region21: #{tpu_custom_call.1} parent=1 // pred_fallthru
      _
    // Predicated region
    $region22: #{tpu_custom_call.1} parent=1 // pred_check
      _
    $region23: #{tpu_custom_call.1} parent=1 // pred_check_branch
      %54 = sbr.rel (0) target = $region25
    $region24: #{tpu_custom_call.1} parent=1 // pred_region
      %55 = dma.done [#allocation6], 128
    $region25: #{tpu_custom_call.1} parent=1 // pred_fallthru
      _
    // Predicated region
    $region26: #{tpu_custom_call.1} parent=1 // pred_check
      _
    $region27: #{tpu_custom_call.1} parent=1 // pred_check_branch
      %57 = sbr.rel (0) target = $region29
    $region28: #{tpu_custom_call.1} parent=1 // pred_region
      %58 = dma.done [#allocation6], 8192
    $region29: #{tpu_custom_call.1} parent=1 // pred_fallthru
      _
    %v60 = vld [vmem:[#allocation2] sm:$0xf]
    %v61 = vld [vmem:[#allocation2 + $0x4] sm:$0xf]
    %v62 = vld [vmem:[#allocation5] sm:$0xf]
    %v63 = vld [vmem:[#allocation5 + $0x4] sm:$0xf]
    %v66 = vunpack.c.l.b16 %v60
    %v67 = vunpack.c.l.b16 %v61
    %v68 = vpack.c.b16 %v67, %v66
    %v71 = vunpack.c.l.b16 %v62
    %v72 = vunpack.c.l.b16 %v63
    %v73 = vpack.c.b16 %v72, %v71
    %vm75 = vcmask 130048
    %v77 = vsel %vm75, %v68, 0
    %79 = vmatprep.subr.bf16.mxu0 0
    %80 = vmatpush1.bf16.msra.mxu0 0
    %81 = vmatprep.subr.bf16.mxu0 0
    %82 = vmatpush1.bf16.msra.mxu0 0
    %83 = vmatprep.subr.bf16.mxu0 0
    %84 = vmatpush1.bf16.msra.mxu0 0
    %85 = vmatprep.subr.bf16.mxu0 0
    %86 = vmatpush1.bf16.msra.mxu0 0
    %87 = vmatprep.subr.bf16.mxu0 0
    %88 = vmatpush1.bf16.msra.mxu0 0
    %89 = vmatprep.subr.bf16.mxu0 0
    %90 = vmatpush1.bf16.msra.mxu0 0
    %91 = vmatprep.subr.bf16.mxu0 0
    %92 = vmatpush1.bf16.msra.mxu0 0
    %93 = vmatprep.subr.bf16.mxu0 0
    %94 = vmatpush1.bf16.msra.mxu0 %v73
    %95 = vmatprep.subr.bf16.mxu0 0
    %96 = vmatpush2.bf16.msra.mxu0 0
    %97 = vmatprep.subr.bf16.mxu0 0
    %98 = vmatpush2.bf16.msra.mxu0 0
    %99 = vmatprep.subr.bf16.mxu0 0
    %100 = vmatpush2.bf16.msra.mxu0 0
    %101 = vmatprep.subr.bf16.mxu0 0
    %102 = vmatpush2.bf16.msra.mxu0 0
    %103 = vmatprep.subr.bf16.mxu0 0
    %104 = vmatpush2.bf16.msra.mxu0 0
    %105 = vmatprep.subr.bf16.mxu0 0
    %106 = vmatpush2.bf16.msra.mxu0 0
    %107 = vmatprep.subr.bf16.mxu0 0
    %108 = vmatpush2.bf16.msra.mxu0 0
    %109 = vmatprep.subr.bf16.mxu0 0
    %110 = vmatpush2.bf16.msra.mxu0 0
    %111 = vmatprep.mubr.bf16.mxu0 0
    %112 = vmatmul.mubr.bf16.gmra.mxu0 %v77
    %v113 = vpop.f32.mrf.mxu0
    %v114 = vadd.f32 0.0, %v113
    %v115 = vpop.f32.mrf.mxu0
    %v116 = vpop.f32.mrf.mxu0
    %v117 = vadd.f32 0.0, %v116
    %v118 = vpop.f32.mrf.mxu0
    %119 = vdwg.mxu0
    %v120 = vpack.c.bf16 %v117, %v114
    %v121 = vld [vmem:[#allocation7] sm:$0xf]
    %v122 = vld [vmem:[#allocation7 + $0x4] sm:$0xf]
    %v123 = vld [vmem:[#allocation7 + $0x8] sm:$0xf]
    %v124 = vld [vmem:[#allocation7 + $0xc] sm:$0xf]
    %v125 = vld [vmem:[#allocation7 + $0x10] sm:$0xf]
    %v126 = vld [vmem:[#allocation7 + $0x14] sm:$0xf]
    %v127 = vld [vmem:[#allocation7 + $0x18] sm:$0xf]
    %v128 = vld [vmem:[#allocation7 + $0x1c] sm:$0xf]
    %v129 = vld [vmem:[#allocation7 + $0x20] sm:$0xf]
    %v130 = vld [vmem:[#allocation7 + $0x24] sm:$0xf]
    %v131 = vld [vmem:[#allocation7 + $0x28] sm:$0xf]
    %v132 = vld [vmem:[#allocation7 + $0x2c] sm:$0xf]
    %v133 = vld [vmem:[#allocation7 + $0x30] sm:$0xf]
    %v134 = vld [vmem:[#allocation7 + $0x34] sm:$0xf]
    %v135 = vld [vmem:[#allocation7 + $0x38] sm:$0xf]
    %v136 = vld [vmem:[#allocation7 + $0x3c] sm:$0xf]
    %v137 = vld [vmem:[#allocation7 + $0x40] sm:$0xf]
    %v138 = vld [vmem:[#allocation7 + $0x44] sm:$0xf]
    %v139 = vld [vmem:[#allocation7 + $0x48] sm:$0xf]
    %v140 = vld [vmem:[#allocation7 + $0x4c] sm:$0xf]
    %v141 = vld [vmem:[#allocation7 + $0x50] sm:$0xf]
    %v142 = vld [vmem:[#allocation7 + $0x54] sm:$0xf]
    %v143 = vld [vmem:[#allocation7 + $0x58] sm:$0xf]
    %v144 = vld [vmem:[#allocation7 + $0x5c] sm:$0xf]
    %v145 = vld [vmem:[#allocation7 + $0x60] sm:$0xf]
    %v146 = vld [vmem:[#allocation7 + $0x64] sm:$0xf]
    %v147 = vld [vmem:[#allocation7 + $0x68] sm:$0xf]
    %v148 = vld [vmem:[#allocation7 + $0x6c] sm:$0xf]
    %v149 = vld [vmem:[#allocation7 + $0x70] sm:$0xf]
    %v150 = vld [vmem:[#allocation7 + $0x74] sm:$0xf]
    %v151 = vld [vmem:[#allocation7 + $0x78] sm:$0xf]
    %v152 = vld [vmem:[#allocation7 + $0x7c] sm:$0xf]
    %v153 = vld [vmem:[%s3] sm:$0x1]
    %v155 = vlaneseq
    %v156 = vshrl.u32 %v155, 7
    %v157 = vsub.s32 0, %v156
    %v158 = vrot.slane %v153, %v157
    %v192 = vunpack.c.l.b16 %v121
    %v193 = vunpack.c.l.b16 %v122
    %v194 = vunpack.c.l.b16 %v123
    %v195 = vunpack.c.l.b16 %v124
    %v196 = vunpack.c.l.b16 %v125
    %v197 = vunpack.c.l.b16 %v126
    %v198 = vunpack.c.l.b16 %v127
    %v199 = vunpack.c.l.b16 %v128
    %v200 = vunpack.c.l.b16 %v129
    %v201 = vunpack.c.l.b16 %v130
    %v202 = vunpack.c.l.b16 %v131
    %v203 = vunpack.c.l.b16 %v132
    %v204 = vunpack.c.l.b16 %v133
    %v205 = vunpack.c.l.b16 %v134
    %v206 = vunpack.c.l.b16 %v135
    %v207 = vunpack.c.l.b16 %v136
    %v208 = vunpack.c.l.b16 %v137
    %v209 = vunpack.c.l.b16 %v138
    %v210 = vunpack.c.l.b16 %v139
    %v211 = vunpack.c.l.b16 %v140
    %v212 = vunpack.c.l.b16 %v141
    %v213 = vunpack.c.l.b16 %v142
    %v214 = vunpack.c.l.b16 %v143
    %v215 = vunpack.c.l.b16 %v144
    %v216 = vunpack.c.l.b16 %v145
    %v217 = vunpack.c.l.b16 %v146
    %v218 = vunpack.c.l.b16 %v147
    %v219 = vunpack.c.l.b16 %v148
    %v220 = vunpack.c.l.b16 %v149
    %v221 = vunpack.c.l.b16 %v150
    %v222 = vunpack.c.l.b16 %v151
    %v223 = vunpack.c.l.b16 %v152
    %v224 = vpack.c.b16 %v193, %v192
    %v225 = vpack.c.b16 %v195, %v194
    %v226 = vpack.c.b16 %v197, %v196
    %v227 = vpack.c.b16 %v199, %v198
    %v228 = vpack.c.b16 %v201, %v200
    %v229 = vpack.c.b16 %v203, %v202
    %v230 = vpack.c.b16 %v205, %v204
    %v231 = vpack.c.b16 %v207, %v206
    %v232 = vpack.c.b16 %v209, %v208
    %v233 = vpack.c.b16 %v211, %v210
    %v234 = vpack.c.b16 %v213, %v212
    %v235 = vpack.c.b16 %v215, %v214
    %v236 = vpack.c.b16 %v217, %v216
    %v237 = vpack.c.b16 %v219, %v218
    %v238 = vpack.c.b16 %v221, %v220
    %v239 = vpack.c.b16 %v223, %v222
    %256 = vmatprep.subr.bf16.mxu0 0
    %257 = vmatpush1.bf16.msra.mxu0 %v231
    %258 = vmatprep.subr.bf16.mxu0 0
    %259 = vmatpush1.bf16.msra.mxu0 %v230
    %260 = vmatprep.subr.bf16.mxu0 0
    %261 = vmatpush1.bf16.msra.mxu0 %v229
    %262 = vmatprep.subr.bf16.mxu0 0
    %263 = vmatpush1.bf16.msra.mxu0 %v228
    %264 = vmatprep.subr.bf16.mxu0 0
    %265 = vmatpush1.bf16.msra.mxu0 %v227
    %266 = vmatprep.subr.bf16.mxu0 0
    %267 = vmatpush1.bf16.msra.mxu0 %v226
    %268 = vmatprep.subr.bf16.mxu0 0
    %269 = vmatpush1.bf16.msra.mxu0 %v225
    %270 = vmatprep.subr.bf16.mxu0 0
    %271 = vmatpush1.bf16.msra.mxu0 %v224
    %272 = vmatprep.subr.bf16.mxu0 0
    %273 = vmatpush2.bf16.msra.mxu0 %v239
    %274 = vmatprep.subr.bf16.mxu0 0
    %275 = vmatpush2.bf16.msra.mxu0 %v238
    %276 = vmatprep.subr.bf16.mxu0 0
    %277 = vmatpush2.bf16.msra.mxu0 %v237
    %278 = vmatprep.subr.bf16.mxu0 0
    %279 = vmatpush2.bf16.msra.mxu0 %v236
    %280 = vmatprep.subr.bf16.mxu0 0
    %281 = vmatpush2.bf16.msra.mxu0 %v235
    %282 = vmatprep.subr.bf16.mxu0 0
    %283 = vmatpush2.bf16.msra.mxu0 %v234
    %284 = vmatprep.subr.bf16.mxu0 0
    %285 = vmatpush2.bf16.msra.mxu0 %v233
    %286 = vmatprep.subr.bf16.mxu0 0
    %287 = vmatpush2.bf16.msra.mxu0 %v232
    %288 = vmatprep.mubr.bf16.mxu0 %v73
    %289 = vmatmul.mubr.bf16.gmra.mxu0 %v120
    %v290 = vpop.f32.mrf.mxu0
    %v291 = vadd.f32 %v158, %v290
    %v292 = vpop.f32.mrf.mxu0
    %v293 = vpop.f32.mrf.mxu0
    %v294 = vadd.f32 %v158, %v293
    %v295 = vpop.f32.mrf.mxu0
    %296 = vdwg.mxu0
    %v297 = vmax.f32 %v291, 0.0
    %v298 = vmax.f32 %v294, 0.0
    %v299 = vpack.c.bf16 %v298, %v297
    %300 = vmatprep.subr.bf16.mxu0 0
    %301 = vmatpush1.bf16.msra.mxu0 0
    %302 = vmatprep.subr.bf16.mxu0 0
    %303 = vmatpush1.bf16.msra.mxu0 0
    %304 = vmatprep.subr.bf16.mxu0 0
    %305 = vmatpush1.bf16.msra.mxu0 0
    %306 = vmatprep.subr.bf16.mxu0 0
    %307 = vmatpush1.bf16.msra.mxu0 0
    %308 = vmatprep.subr.bf16.mxu0 0
    %309 = vmatpush1.bf16.msra.mxu0 0
    %310 = vmatprep.subr.bf16.mxu0 0
    %311 = vmatpush1.bf16.msra.mxu0 0
    %312 = vmatprep.subr.bf16.mxu0 0
    %313 = vmatpush1.bf16.msra.mxu0 0
    %314 = vmatprep.subr.bf16.mxu0 0
    %315 = vmatpush1.bf16.msra.mxu0 %v299
    %316 = vmatprep.subr.bf16.mxu0 0
    %317 = vmatpush2.bf16.msra.mxu0 0
    %318 = vmatprep.subr.bf16.mxu0 0
    %319 = vmatpush2.bf16.msra.mxu0 0
    %320 = vmatprep.subr.bf16.mxu0 0
    %321 = vmatpush2.bf16.msra.mxu0 0
    %322 = vmatprep.subr.bf16.mxu0 0
    %323 = vmatpush2.bf16.msra.mxu0 0
    %324 = vmatprep.subr.bf16.mxu0 0
    %325 = vmatpush2.bf16.msra.mxu0 0
    %326 = vmatprep.subr.bf16.mxu0 0
    %327 = vmatpush2.bf16.msra.mxu0 0
    %328 = vmatprep.subr.bf16.mxu0 0
    %329 = vmatpush2.bf16.msra.mxu0 0
    %330 = vmatprep.subr.bf16.mxu0 0
    %331 = vmatpush2.bf16.msra.mxu0 0
    %332 = vmatprep.mubr.bf16.mxu0 0
    %333 = vmatmul.mubr.bf16.gmra.mxu0 %v77
    %v334 = vpop.f32.mrf.mxu0
    %v335 = vadd.f32 0.0, %v334
    %v336 = vpop.f32.mrf.mxu0
    %v337 = vpop.f32.mrf.mxu0
    %v338 = vadd.f32 0.0, %v337
    %v339 = vpop.f32.mrf.mxu0
    %340 = vdwg.mxu0
    %v341 = vpack.c.bf16 %v338, %v335
    %s342 = scalar_lea.vmem [#allocation7], 128
    %v343 = vld [vmem:[%s342] sm:$0xf]
    %v344 = vld [vmem:[%s342 + $0x4] sm:$0xf]
    %v345 = vld [vmem:[%s342 + $0x8] sm:$0xf]
    %v346 = vld [vmem:[%s342 + $0xc] sm:$0xf]
    %v347 = vld [vmem:[%s342 + $0x10] sm:$0xf]
    %v348 = vld [vmem:[%s342 + $0x14] sm:$0xf]
    %v349 = vld [vmem:[%s342 + $0x18] sm:$0xf]
    %v350 = vld [vmem:[%s342 + $0x1c] sm:$0xf]
    %v351 = vld [vmem:[%s342 + $0x20] sm:$0xf]
    %v352 = vld [vmem:[%s342 + $0x24] sm:$0xf]
    %v353 = vld [vmem:[%s342 + $0x28] sm:$0xf]
    %v354 = vld [vmem:[%s342 + $0x2c] sm:$0xf]
    %v355 = vld [vmem:[%s342 + $0x30] sm:$0xf]
    %v356 = vld [vmem:[%s342 + $0x34] sm:$0xf]
    %v357 = vld [vmem:[%s342 + $0x38] sm:$0xf]
    %v358 = vld [vmem:[%s342 + $0x3c] sm:$0xf]
    %v359 = vld [vmem:[%s342 + $0x40] sm:$0xf]
    %v360 = vld [vmem:[%s342 + $0x44] sm:$0xf]
    %v361 = vld [vmem:[%s342 + $0x48] sm:$0xf]
    %v362 = vld [vmem:[%s342 + $0x4c] sm:$0xf]
    %v363 = vld [vmem:[%s342 + $0x50] sm:$0xf]
    %v364 = vld [vmem:[%s342 + $0x54] sm:$0xf]
    %v365 = vld [vmem:[%s342 + $0x58] sm:$0xf]
    %v366 = vld [vmem:[%s342 + $0x5c] sm:$0xf]
    %v367 = vld [vmem:[%s342 + $0x60] sm:$0xf]
    %v368 = vld [vmem:[%s342 + $0x64] sm:$0xf]
    %v369 = vld [vmem:[%s342 + $0x68] sm:$0xf]
    %v370 = vld [vmem:[%s342 + $0x6c] sm:$0xf]
    %v371 = vld [vmem:[%s342 + $0x70] sm:$0xf]
    %v372 = vld [vmem:[%s342 + $0x74] sm:$0xf]
    %v373 = vld [vmem:[%s342 + $0x78] sm:$0xf]
    %v374 = vld [vmem:[%s342 + $0x7c] sm:$0xf]
    %s375 = scalar_lea.vmem %s3, 1
    %v376 = vld [vmem:[%s375] sm:$0x1]
    %v378 = vlaneseq
    %v379 = vshrl.u32 %v378, 7
    %v380 = vsub.s32 0, %v379
    %v381 = vrot.slane %v376, %v380
    %v415 = vunpack.c.l.b16 %v343
    %v416 = vunpack.c.l.b16 %v344
    %v417 = vunpack.c.l.b16 %v345
    %v418 = vunpack.c.l.b16 %v346
    %v419 = vunpack.c.l.b16 %v347
    %v420 = vunpack.c.l.b16 %v348
    %v421 = vunpack.c.l.b16 %v349
    %v422 = vunpack.c.l.b16 %v350
    %v423 = vunpack.c.l.b16 %v351
    %v424 = vunpack.c.l.b16 %v352
    %v425 = vunpack.c.l.b16 %v353
    %v426 = vunpack.c.l.b16 %v354
    %v427 = vunpack.c.l.b16 %v355
    %v428 = vunpack.c.l.b16 %v356
    %v429 = vunpack.c.l.b16 %v357
    %v430 = vunpack.c.l.b16 %v358
    %v431 = vunpack.c.l.b16 %v359
    %v432 = vunpack.c.l.b16 %v360
    %v433 = vunpack.c.l.b16 %v361
    %v434 = vunpack.c.l.b16 %v362
    %v435 = vunpack.c.l.b16 %v363
    %v436 = vunpack.c.l.b16 %v364
    %v437 = vunpack.c.l.b16 %v365
    %v438 = vunpack.c.l.b16 %v366
    %v439 = vunpack.c.l.b16 %v367
    %v440 = vunpack.c.l.b16 %v368
    %v441 = vunpack.c.l.b16 %v369
    %v442 = vunpack.c.l.b16 %v370
    %v443 = vunpack.c.l.b16 %v371
    %v444 = vunpack.c.l.b16 %v372
    %v445 = vunpack.c.l.b16 %v373
    %v446 = vunpack.c.l.b16 %v374
    %v447 = vpack.c.b16 %v416, %v415
    %v448 = vpack.c.b16 %v418, %v417
    %v449 = vpack.c.b16 %v420, %v419
    %v450 = vpack.c.b16 %v422, %v421
    %v451 = vpack.c.b16 %v424, %v423
    %v452 = vpack.c.b16 %v426, %v425
    %v453 = vpack.c.b16 %v428, %v427
    %v454 = vpack.c.b16 %v430, %v429
    %v455 = vpack.c.b16 %v432, %v431
    %v456 = vpack.c.b16 %v434, %v433
    %v457 = vpack.c.b16 %v436, %v435
    %v458 = vpack.c.b16 %v438, %v437
    %v459 = vpack.c.b16 %v440, %v439
    %v460 = vpack.c.b16 %v442, %v441
    %v461 = vpack.c.b16 %v444, %v443
    %v462 = vpack.c.b16 %v446, %v445
    %479 = vmatprep.subr.bf16.mxu0 0
    %480 = vmatpush1.bf16.msra.mxu0 %v454
    %481 = vmatprep.subr.bf16.mxu0 0
    %482 = vmatpush1.bf16.msra.mxu0 %v453
    %483 = vmatprep.subr.bf16.mxu0 0
    %484 = vmatpush1.bf16.msra.mxu0 %v452
    %485 = vmatprep.subr.bf16.mxu0 0
    %486 = vmatpush1.bf16.msra.mxu0 %v451
    %487 = vmatprep.subr.bf16.mxu0 0
    %488 = vmatpush1.bf16.msra.mxu0 %v450
    %489 = vmatprep.subr.bf16.mxu0 0
    %490 = vmatpush1.bf16.msra.mxu0 %v449
    %491 = vmatprep.subr.bf16.mxu0 0
    %492 = vmatpush1.bf16.msra.mxu0 %v448
    %493 = vmatprep.subr.bf16.mxu0 0
    %494 = vmatpush1.bf16.msra.mxu0 %v447
    %495 = vmatprep.subr.bf16.mxu0 0
    %496 = vmatpush2.bf16.msra.mxu0 %v462
    %497 = vmatprep.subr.bf16.mxu0 0
    %498 = vmatpush2.bf16.msra.mxu0 %v461
    %499 = vmatprep.subr.bf16.mxu0 0
    %500 = vmatpush2.bf16.msra.mxu0 %v460
    %501 = vmatprep.subr.bf16.mxu0 0
    %502 = vmatpush2.bf16.msra.mxu0 %v459
    %503 = vmatprep.subr.bf16.mxu0 0
    %504 = vmatpush2.bf16.msra.mxu0 %v458
    %505 = vmatprep.subr.bf16.mxu0 0
    %506 = vmatpush2.bf16.msra.mxu0 %v457
    %507 = vmatprep.subr.bf16.mxu0 0
    %508 = vmatpush2.bf16.msra.mxu0 %v456
    %509 = vmatprep.subr.bf16.mxu0 0
    %510 = vmatpush2.bf16.msra.mxu0 %v455
    %511 = vmatprep.mubr.bf16.mxu0 %v299
    %512 = vmatmul.mubr.bf16.gmra.mxu0 %v341
    %v513 = vpop.f32.mrf.mxu0
    %v514 = vadd.f32 %v381, %v513
    %v515 = vpop.f32.mrf.mxu0
    %v516 = vpop.f32.mrf.mxu0
    %v517 = vadd.f32 %v381, %v516
    %v518 = vpop.f32.mrf.mxu0
    %519 = vdwg.mxu0
    %vm520 = vcmp.gt.f32.partialorder %v514, 0.0
    %vm521 = vcmp.gt.f32.partialorder %v517, 0.0
    %v522 = vmin.f32 %v514, 0.0
    %v523 = vmin.f32 %v517, 0.0
    %v524 = vmul.f32 %v522, 1.442695
    %v525 = vpow.pop %v524
    %v526 = vmul.f32 %v523, 1.442695
    %v527 = vpow.pop %v526
    %v528 = vsub.f32 %v525, 1.0
    %v529 = vsub.f32 %v527, 1.0
    %v530 = vsel %vm520, %v514, %v528
    %v531 = vsel %vm521, %v517, %v529
    %v532 = vpack.c.bf16 %v531, %v530
    %533 = vmatprep.subr.bf16.mxu0 0
    %534 = vmatpush1.bf16.msra.mxu0 0
    %535 = vmatprep.subr.bf16.mxu0 0
    %536 = vmatpush1.bf16.msra.mxu0 0
    %537 = vmatprep.subr.bf16.mxu0 0
    %538 = vmatpush1.bf16.msra.mxu0 0
    %539 = vmatprep.subr.bf16.mxu0 0
    %540 = vmatpush1.bf16.msra.mxu0 0
    %541 = vmatprep.subr.bf16.mxu0 0
    %542 = vmatpush1.bf16.msra.mxu0 0
    %543 = vmatprep.subr.bf16.mxu0 0
    %544 = vmatpush1.bf16.msra.mxu0 0
    %545 = vmatprep.subr.bf16.mxu0 0
    %546 = vmatpush1.bf16.msra.mxu0 0
    %547 = vmatprep.subr.bf16.mxu0 0
    %548 = vmatpush1.bf16.msra.mxu0 %v532
    %549 = vmatprep.subr.bf16.mxu0 0
    %550 = vmatpush2.bf16.msra.mxu0 0
    %551 = vmatprep.subr.bf16.mxu0 0
    %552 = vmatpush2.bf16.msra.mxu0 0
    %553 = vmatprep.subr.bf16.mxu0 0
    %554 = vmatpush2.bf16.msra.mxu0 0
    %555 = vmatprep.subr.bf16.mxu0 0
    %556 = vmatpush2.bf16.msra.mxu0 0
    %557 = vmatprep.subr.bf16.mxu0 0
    %558 = vmatpush2.bf16.msra.mxu0 0
    %559 = vmatprep.subr.bf16.mxu0 0
    %560 = vmatpush2.bf16.msra.mxu0 0
    %561 = vmatprep.subr.bf16.mxu0 0
    %562 = vmatpush2.bf16.msra.mxu0 0
    %563 = vmatprep.subr.bf16.mxu0 0
    %564 = vmatpush2.bf16.msra.mxu0 0
    %565 = vmatprep.mubr.bf16.mxu0 0
    %566 = vmatmul.mubr.bf16.gmra.mxu0 %v77
    %v567 = vpop.f32.mrf.mxu0
    %v568 = vadd.f32 0.0, %v567
    %v569 = vpop.f32.mrf.mxu0
    %v570 = vpop.f32.mrf.mxu0
    %v571 = vadd.f32 0.0, %v570
    %v572 = vpop.f32.mrf.mxu0
    %573 = vdwg.mxu0
    %v574 = vpack.c.bf16 %v571, %v568
    %s575 = scalar_lea.vmem [#allocation7], 256
    %v576 = vld [vmem:[%s575] sm:$0xf]
    %v577 = vld [vmem:[%s575 + $0x4] sm:$0xf]
    %v578 = vld [vmem:[%s575 + $0x8] sm:$0xf]
    %v579 = vld [vmem:[%s575 + $0xc] sm:$0xf]
    %v580 = vld [vmem:[%s575 + $0x10] sm:$0xf]
    %v581 = vld [vmem:[%s575 + $0x14] sm:$0xf]
    %v582 = vld [vmem:[%s575 + $0x18] sm:$0xf]
    %v583 = vld [vmem:[%s575 + $0x1c] sm:$0xf]
    %v584 = vld [vmem:[%s575 + $0x20] sm:$0xf]
    %v585 = vld [vmem:[%s575 + $0x24] sm:$0xf]
    %v586 = vld [vmem:[%s575 + $0x28] sm:$0xf]
    %v587 = vld [vmem:[%s575 + $0x2c] sm:$0xf]
    %v588 = vld [vmem:[%s575 + $0x30] sm:$0xf]
    %v589 = vld [vmem:[%s575 + $0x34] sm:$0xf]
    %v590 = vld [vmem:[%s575 + $0x38] sm:$0xf]
    %v591 = vld [vmem:[%s575 + $0x3c] sm:$0xf]
    %v592 = vld [vmem:[%s575 + $0x40] sm:$0xf]
    %v593 = vld [vmem:[%s575 + $0x44] sm:$0xf]
    %v594 = vld [vmem:[%s575 + $0x48] sm:$0xf]
    %v595 = vld [vmem:[%s575 + $0x4c] sm:$0xf]
    %v596 = vld [vmem:[%s575 + $0x50] sm:$0xf]
    %v597 = vld [vmem:[%s575 + $0x54] sm:$0xf]
    %v598 = vld [vmem:[%s575 + $0x58] sm:$0xf]
    %v599 = vld [vmem:[%s575 + $0x5c] sm:$0xf]
    %v600 = vld [vmem:[%s575 + $0x60] sm:$0xf]
    %v601 = vld [vmem:[%s575 + $0x64] sm:$0xf]
    %v602 = vld [vmem:[%s575 + $0x68] sm:$0xf]
    %v603 = vld [vmem:[%s575 + $0x6c] sm:$0xf]
    %v604 = vld [vmem:[%s575 + $0x70] sm:$0xf]
    %v605 = vld [vmem:[%s575 + $0x74] sm:$0xf]
    %v606 = vld [vmem:[%s575 + $0x78] sm:$0xf]
    %v607 = vld [vmem:[%s575 + $0x7c] sm:$0xf]
    %s608 = scalar_lea.vmem %s3, 2
    %v609 = vld [vmem:[%s608] sm:$0x1]
    %v611 = vlaneseq
    %v612 = vshrl.u32 %v611, 7
    %v613 = vsub.s32 0, %v612
    %v614 = vrot.slane %v609, %v613
    %v648 = vunpack.c.l.b16 %v576
    %v649 = vunpack.c.l.b16 %v577
    %v650 = vunpack.c.l.b16 %v578
    %v651 = vunpack.c.l.b16 %v579
    %v652 = vunpack.c.l.b16 %v580
    %v653 = vunpack.c.l.b16 %v581
    %v654 = vunpack.c.l.b16 %v582
    %v655 = vunpack.c.l.b16 %v583
    %v656 = vunpack.c.l.b16 %v584
    %v657 = vunpack.c.l.b16 %v585
    %v658 = vunpack.c.l.b16 %v586
    %v659 = vunpack.c.l.b16 %v587
    %v660 = vunpack.c.l.b16 %v588
    %v661 = vunpack.c.l.b16 %v589
    %v662 = vunpack.c.l.b16 %v590
    %v663 = vunpack.c.l.b16 %v591
    %v664 = vunpack.c.l.b16 %v592
    %v665 = vunpack.c.l.b16 %v593
    %v666 = vunpack.c.l.b16 %v594
    %v667 = vunpack.c.l.b16 %v595
    %v668 = vunpack.c.l.b16 %v596
    %v669 = vunpack.c.l.b16 %v597
    %v670 = vunpack.c.l.b16 %v598
    %v671 = vunpack.c.l.b16 %v599
    %v672 = vunpack.c.l.b16 %v600
    %v673 = vunpack.c.l.b16 %v601
    %v674 = vunpack.c.l.b16 %v602
    %v675 = vunpack.c.l.b16 %v603
    %v676 = vunpack.c.l.b16 %v604
    %v677 = vunpack.c.l.b16 %v605
    %v678 = vunpack.c.l.b16 %v606
    %v679 = vunpack.c.l.b16 %v607
    %v680 = vpack.c.b16 %v649, %v648
    %v681 = vpack.c.b16 %v651, %v650
    %v682 = vpack.c.b16 %v653, %v652
    %v683 = vpack.c.b16 %v655, %v654
    %v684 = vpack.c.b16 %v657, %v656
    %v685 = vpack.c.b16 %v659, %v658
    %v686 = vpack.c.b16 %v661, %v660
    %v687 = vpack.c.b16 %v663, %v662
    %v688 = vpack.c.b16 %v665, %v664
    %v689 = vpack.c.b16 %v667, %v666
    %v690 = vpack.c.b16 %v669, %v668
    %v691 = vpack.c.b16 %v671, %v670
    %v692 = vpack.c.b16 %v673, %v672
    %v693 = vpack.c.b16 %v675, %v674
    %v694 = vpack.c.b16 %v677, %v676
    %v695 = vpack.c.b16 %v679, %v678
    %712 = vmatprep.subr.bf16.mxu0 0
    %713 = vmatpush1.bf16.msra.mxu0 %v687
    %714 = vmatprep.subr.bf16.mxu0 0
    %715 = vmatpush1.bf16.msra.mxu0 %v686
    %716 = vmatprep.subr.bf16.mxu0 0
    %717 = vmatpush1.bf16.msra.mxu0 %v685
    %718 = vmatprep.subr.bf16.mxu0 0
    %719 = vmatpush1.bf16.msra.mxu0 %v684
    %720 = vmatprep.subr.bf16.mxu0 0
    %721 = vmatpush1.bf16.msra.mxu0 %v683
    %722 = vmatprep.subr.bf16.mxu0 0
    %723 = vmatpush1.bf16.msra.mxu0 %v682
    %724 = vmatprep.subr.bf16.mxu0 0
    %725 = vmatpush1.bf16.msra.mxu0 %v681
    %726 = vmatprep.subr.bf16.mxu0 0
    %727 = vmatpush1.bf16.msra.mxu0 %v680
    %728 = vmatprep.subr.bf16.mxu0 0
    %729 = vmatpush2.bf16.msra.mxu0 %v695
    %730 = vmatprep.subr.bf16.mxu0 0
    %731 = vmatpush2.bf16.msra.mxu0 %v694
    %732 = vmatprep.subr.bf16.mxu0 0
    %733 = vmatpush2.bf16.msra.mxu0 %v693
    %734 = vmatprep.subr.bf16.mxu0 0
    %735 = vmatpush2.bf16.msra.mxu0 %v692
    %736 = vmatprep.subr.bf16.mxu0 0
    %737 = vmatpush2.bf16.msra.mxu0 %v691
    %738 = vmatprep.subr.bf16.mxu0 0
    %739 = vmatpush2.bf16.msra.mxu0 %v690
    %740 = vmatprep.subr.bf16.mxu0 0
    %741 = vmatpush2.bf16.msra.mxu0 %v689
    %742 = vmatprep.subr.bf16.mxu0 0
    %743 = vmatpush2.bf16.msra.mxu0 %v688
    %744 = vmatprep.mubr.bf16.mxu0 %v532
    %745 = vmatmul.mubr.bf16.gmra.mxu0 %v574
    %v746 = vpop.f32.mrf.mxu0
    %v747 = vadd.f32 %v614, %v746
    %v748 = vpop.f32.mrf.mxu0
    %v749 = vpop.f32.mrf.mxu0
    %v750 = vadd.f32 %v614, %v749
    %v751 = vpop.f32.mrf.mxu0
    %752 = vdwg.mxu0
    %v753 = vmax.f32 %v747, 0.0
    %v754 = vmax.f32 %v750, 0.0
    %v755 = vpack.c.bf16 %v754, %v753
    %756 = vmatprep.subr.bf16.mxu0 0
    %757 = vmatpush1.bf16.msra.mxu0 0
    %758 = vmatprep.subr.bf16.mxu0 0
    %759 = vmatpush1.bf16.msra.mxu0 0
    %760 = vmatprep.subr.bf16.mxu0 0
    %761 = vmatpush1.bf16.msra.mxu0 0
    %762 = vmatprep.subr.bf16.mxu0 0
    %763 = vmatpush1.bf16.msra.mxu0 0
    %764 = vmatprep.subr.bf16.mxu0 0
    %765 = vmatpush1.bf16.msra.mxu0 0
    %766 = vmatprep.subr.bf16.mxu0 0
    %767 = vmatpush1.bf16.msra.mxu0 0
    %768 = vmatprep.subr.bf16.mxu0 0
    %769 = vmatpush1.bf16.msra.mxu0 0
    %770 = vmatprep.subr.bf16.mxu0 0
    %771 = vmatpush1.bf16.msra.mxu0 %v755
    %772 = vmatprep.subr.bf16.mxu0 0
    %773 = vmatpush2.bf16.msra.mxu0 0
    %774 = vmatprep.subr.bf16.mxu0 0
    %775 = vmatpush2.bf16.msra.mxu0 0
    %776 = vmatprep.subr.bf16.mxu0 0
    %777 = vmatpush2.bf16.msra.mxu0 0
    %778 = vmatprep.subr.bf16.mxu0 0
    %779 = vmatpush2.bf16.msra.mxu0 0
    %780 = vmatprep.subr.bf16.mxu0 0
    %781 = vmatpush2.bf16.msra.mxu0 0
    %782 = vmatprep.subr.bf16.mxu0 0
    %783 = vmatpush2.bf16.msra.mxu0 0
    %784 = vmatprep.subr.bf16.mxu0 0
    %785 = vmatpush2.bf16.msra.mxu0 0
    %786 = vmatprep.subr.bf16.mxu0 0
    %787 = vmatpush2.bf16.msra.mxu0 0
    %788 = vmatprep.mubr.bf16.mxu0 0
    %789 = vmatmul.mubr.bf16.gmra.mxu0 %v77
    %v790 = vpop.f32.mrf.mxu0
    %v791 = vadd.f32 0.0, %v790
    %v792 = vpop.f32.mrf.mxu0
    %v793 = vpop.f32.mrf.mxu0
    %v794 = vadd.f32 0.0, %v793
    %v795 = vpop.f32.mrf.mxu0
    %796 = vdwg.mxu0
    %v797 = vpack.c.bf16 %v794, %v791
    %s798 = scalar_lea.vmem [#allocation7], 384
    %v799 = vld [vmem:[%s798] sm:$0xf]
    %v800 = vld [vmem:[%s798 + $0x4] sm:$0xf]
    %v801 = vld [vmem:[%s798 + $0x8] sm:$0xf]
    %v802 = vld [vmem:[%s798 + $0xc] sm:$0xf]
    %v803 = vld [vmem:[%s798 + $0x10] sm:$0xf]
    %v804 = vld [vmem:[%s798 + $0x14] sm:$0xf]
    %v805 = vld [vmem:[%s798 + $0x18] sm:$0xf]
    %v806 = vld [vmem:[%s798 + $0x1c] sm:$0xf]
    %v807 = vld [vmem:[%s798 + $0x20] sm:$0xf]
    %v808 = vld [vmem:[%s798 + $0x24] sm:$0xf]
    %v809 = vld [vmem:[%s798 + $0x28] sm:$0xf]
    %v810 = vld [vmem:[%s798 + $0x2c] sm:$0xf]
    %v811 = vld [vmem:[%s798 + $0x30] sm:$0xf]
    %v812 = vld [vmem:[%s798 + $0x34] sm:$0xf]
    %v813 = vld [vmem:[%s798 + $0x38] sm:$0xf]
    %v814 = vld [vmem:[%s798 + $0x3c] sm:$0xf]
    %v815 = vld [vmem:[%s798 + $0x40] sm:$0xf]
    %v816 = vld [vmem:[%s798 + $0x44] sm:$0xf]
    %v817 = vld [vmem:[%s798 + $0x48] sm:$0xf]
    %v818 = vld [vmem:[%s798 + $0x4c] sm:$0xf]
    %v819 = vld [vmem:[%s798 + $0x50] sm:$0xf]
    %v820 = vld [vmem:[%s798 + $0x54] sm:$0xf]
    %v821 = vld [vmem:[%s798 + $0x58] sm:$0xf]
    %v822 = vld [vmem:[%s798 + $0x5c] sm:$0xf]
    %v823 = vld [vmem:[%s798 + $0x60] sm:$0xf]
    %v824 = vld [vmem:[%s798 + $0x64] sm:$0xf]
    %v825 = vld [vmem:[%s798 + $0x68] sm:$0xf]
    %v826 = vld [vmem:[%s798 + $0x6c] sm:$0xf]
    %v827 = vld [vmem:[%s798 + $0x70] sm:$0xf]
    %v828 = vld [vmem:[%s798 + $0x74] sm:$0xf]
    %v829 = vld [vmem:[%s798 + $0x78] sm:$0xf]
    %v830 = vld [vmem:[%s798 + $0x7c] sm:$0xf]
    %s831 = scalar_lea.vmem %s3, 3
    %v832 = vld [vmem:[%s831] sm:$0x1]
    %v834 = vlaneseq
    %v835 = vshrl.u32 %v834, 7
    %v836 = vsub.s32 0, %v835
    %v837 = vrot.slane %v832, %v836
    %v871 = vunpack.c.l.b16 %v799
    %v872 = vunpack.c.l.b16 %v800
    %v873 = vunpack.c.l.b16 %v801
    %v874 = vunpack.c.l.b16 %v802
    %v875 = vunpack.c.l.b16 %v803
    %v876 = vunpack.c.l.b16 %v804
    %v877 = vunpack.c.l.b16 %v805
    %v878 = vunpack.c.l.b16 %v806
    %v879 = vunpack.c.l.b16 %v807
    %v880 = vunpack.c.l.b16 %v808
    %v881 = vunpack.c.l.b16 %v809
    %v882 = vunpack.c.l.b16 %v810
    %v883 = vunpack.c.l.b16 %v811
    %v884 = vunpack.c.l.b16 %v812
    %v885 = vunpack.c.l.b16 %v813
    %v886 = vunpack.c.l.b16 %v814
    %v887 = vunpack.c.l.b16 %v815
    %v888 = vunpack.c.l.b16 %v816
    %v889 = vunpack.c.l.b16 %v817
    %v890 = vunpack.c.l.b16 %v818
    %v891 = vunpack.c.l.b16 %v819
    %v892 = vunpack.c.l.b16 %v820
    %v893 = vunpack.c.l.b16 %v821
    %v894 = vunpack.c.l.b16 %v822
    %v895 = vunpack.c.l.b16 %v823
    %v896 = vunpack.c.l.b16 %v824
    %v897 = vunpack.c.l.b16 %v825
    %v898 = vunpack.c.l.b16 %v826
    %v899 = vunpack.c.l.b16 %v827
    %v900 = vunpack.c.l.b16 %v828
    %v901 = vunpack.c.l.b16 %v829
    %v902 = vunpack.c.l.b16 %v830
    %v903 = vpack.c.b16 %v872, %v871
    %v904 = vpack.c.b16 %v874, %v873
    %v905 = vpack.c.b16 %v876, %v875
    %v906 = vpack.c.b16 %v878, %v877
    %v907 = vpack.c.b16 %v880, %v879
    %v908 = vpack.c.b16 %v882, %v881
    %v909 = vpack.c.b16 %v884, %v883
    %v910 = vpack.c.b16 %v886, %v885
    %v911 = vpack.c.b16 %v888, %v887
    %v912 = vpack.c.b16 %v890, %v889
    %v913 = vpack.c.b16 %v892, %v891
    %v914 = vpack.c.b16 %v894, %v893
    %v915 = vpack.c.b16 %v896, %v895
    %v916 = vpack.c.b16 %v898, %v897
    %v917 = vpack.c.b16 %v900, %v899
    %v918 = vpack.c.b16 %v902, %v901
    %935 = vmatprep.subr.bf16.mxu0 0
    %936 = vmatpush1.bf16.msra.mxu0 %v910
    %937 = vmatprep.subr.bf16.mxu0 0
    %938 = vmatpush1.bf16.msra.mxu0 %v909
    %939 = vmatprep.subr.bf16.mxu0 0
    %940 = vmatpush1.bf16.msra.mxu0 %v908
    %941 = vmatprep.subr.bf16.mxu0 0
    %942 = vmatpush1.bf16.msra.mxu0 %v907
    %943 = vmatprep.subr.bf16.mxu0 0
    %944 = vmatpush1.bf16.msra.mxu0 %v906
    %945 = vmatprep.subr.bf16.mxu0 0
    %946 = vmatpush1.bf16.msra.mxu0 %v905
    %947 = vmatprep.subr.bf16.mxu0 0
    %948 = vmatpush1.bf16.msra.mxu0 %v904
    %949 = vmatprep.subr.bf16.mxu0 0
    %950 = vmatpush1.bf16.msra.mxu0 %v903
    %951 = vmatprep.subr.bf16.mxu0 0
    %952 = vmatpush2.bf16.msra.mxu0 %v918
    %953 = vmatprep.subr.bf16.mxu0 0
    %954 = vmatpush2.bf16.msra.mxu0 %v917
    %955 = vmatprep.subr.bf16.mxu0 0
    %956 = vmatpush2.bf16.msra.mxu0 %v916
    %957 = vmatprep.subr.bf16.mxu0 0
    %958 = vmatpush2.bf16.msra.mxu0 %v915
    %959 = vmatprep.subr.bf16.mxu0 0
    %960 = vmatpush2.bf16.msra.mxu0 %v914
    %961 = vmatprep.subr.bf16.mxu0 0
    %962 = vmatpush2.bf16.msra.mxu0 %v913
    %963 = vmatprep.subr.bf16.mxu0 0
    %964 = vmatpush2.bf16.msra.mxu0 %v912
    %965 = vmatprep.subr.bf16.mxu0 0
    %966 = vmatpush2.bf16.msra.mxu0 %v911
    %967 = vmatprep.mubr.bf16.mxu0 %v755
    %968 = vmatmul.mubr.bf16.gmra.mxu0 %v797
    %v969 = vpop.f32.mrf.mxu0
    %v970 = vadd.f32 %v837, %v969
    %v971 = vpop.f32.mrf.mxu0
    %v972 = vpop.f32.mrf.mxu0
    %v973 = vadd.f32 %v837, %v972
    %v974 = vpop.f32.mrf.mxu0
    %975 = vdwg.mxu0
    %vm976 = vcmp.gt.f32.partialorder %v970, 0.0
    %vm977 = vcmp.gt.f32.partialorder %v973, 0.0
    %v978 = vmin.f32 %v970, 0.0
    %v979 = vmin.f32 %v973, 0.0
    %v980 = vmul.f32 %v978, 1.442695
    %v981 = vpow.pop %v980
    %v982 = vmul.f32 %v979, 1.442695
    %v983 = vpow.pop %v982
    %v984 = vsub.f32 %v981, 1.0
    %v985 = vsub.f32 %v983, 1.0
    %v986 = vsel %vm976, %v970, %v984
    %v987 = vsel %vm977, %v973, %v985
    %988 = vst [vmem:[#allocation8] sm:$0xff] %v986
    %989 = vst [vmem:[#allocation8 + $0x8] sm:$0xff] %v987
    // Predicated region
    $region30: #{tpu_custom_call.1} parent=1 // pred_check
      _
    $region31: #{tpu_custom_call.1} parent=1 // pred_check_branch
      %991 = sbr.rel (0) target = $region33
    $region32: #{tpu_custom_call.1} parent=1 // pred_region
      %s993 = ssub.s32 256, 256
      %994 = vsyncadd [#allocation4], %s993
      %s995 = sshll.u32 [#allocation8], 4
      %s996 = int_to_ptr.vmem [resolvable:$true] %s995
      %1001 = dma.vmem_to_hbm [thread:$0]  %s996, 256, %s4, [#allocation4], 128, 128, 8
    $region33: #{tpu_custom_call.1} parent=1 // pred_fallthru
      _
    // Predicated region
    $region34: #{tpu_custom_call.1} parent=1 // pred_check
      _
    $region35: #{tpu_custom_call.1} parent=1 // pred_check_branch
      %1003 = sbr.rel (0) target = $region37
    $region36: #{tpu_custom_call.1} parent=1 // pred_region
      %1004 = dma.done [#allocation4], 256
    $region37: #{tpu_custom_call.1} parent=1 // pred_fallthru
      _
    %1005 = vsyncpa [#allocation3], 1
    %1006 = vsyncpa [#allocation6], 1
    %1007 = vsyncpa [#allocation4], 1

</llo_original>
